<compile_context>
chip_gen: v5e
topology: v5e:2x2
jax: 0.10.0
libtpu: 0.0.40
codegen_flags: <defaults>
</compile_context>

<pallas_src>
import functools

import jax
import jax.numpy as jnp
from jax.experimental import pallas as pl
from jax.experimental.pallas import tpu as pltpu


def _round_up(x: int, m: int) -> int:
    return (x + m - 1) // m * m


def _pick_batch_tile(B: int) -> int:
    """Generation-aware batch tile: bigger tiles amortize the ~0.35us/step grid
    overhead; capped on v7x (64 MiB VMEM) and split >=2 ways for its 2 TCs."""
    try:
        info = pltpu.get_tpu_info()
        vmem = getattr(info, "vmem_capacity_bytes", 128 << 20) or (128 << 20)
    except Exception:  # non-TPU trace / older API -- fall back to a safe default
        vmem = 128 << 20
    small_vmem = vmem <= (64 << 20)          # v7x-class chip
    base = 256 if small_vmem else 512        # v5e/v6e: 128 MiB -> larger tiles
    if B <= base:
        tb = B                               # full-extent batch block (always legal)
        if small_vmem and B >= 64:
            # v7x megacore: make sure the "parallel" batch axis has >=2 steps.
            tb = _round_up(pl.cdiv(B, 2), 8)
        return tb
    return base


def _vmem_limit_bytes(buffer_bytes: int) -> int:
    """Explicit scoped-VMEM limit from the real buffer budget (+ headroom for
    Mosaic internal scratch), clamped to a range that is safe on v5e/v6e
    (128 MiB physical) and v7x (64 MiB physical)."""
    need = int(buffer_bytes * 1.25) + (4 << 20)
    return max(32 << 20, min(need, 64 << 20))


def _param_spec(shape, index_map, single_buffer: bool) -> pl.BlockSpec:
    """BlockSpec for a VMEM-resident parameter (constant index_map).  Double
    buffering a constant block hides nothing -- single-buffer it to halve its
    VMEM footprint."""
    if single_buffer:
        return pl.BlockSpec(shape, index_map, pipeline_mode=pl.Buffered(1))
    return pl.BlockSpec(shape, index_map)


# --------------------------------------------------------------------------- #
# Kernels
# --------------------------------------------------------------------------- #
def _mlp_resident_kernel(x_ref, w1_ref, b1_ref, w2_ref, b2_ref, o_ref, *, d_in):
    # x_ref : (tb, d_in)      f32   streamed per batch tile (bf16 cast done here)
    # w1_ref: (d_in_p, h_p)   bf16  VMEM-resident, K zero-padded
    # b1_ref: (1, h_p)        f32   VMEM-resident
    # w2_ref: (h_p, o_p)      bf16  VMEM-resident
    # b2_ref: (1, o_p)        f32   VMEM-resident
    # o_ref : (tb, o_p)       f32   lane-dense store (o_p % 128 == 0)
    x = x_ref[...].astype(jnp.bfloat16)       # in-kernel cast: VPU filler under MXU slack
    w1 = w1_ref[:d_in, :]                     # static slice -> drop zero K-padding rows
    h = jnp.dot(x, w1, preferred_element_type=jnp.float32)
    h = jnp.maximum(h + b1_ref[...], 0.0)     # bias + ReLU in f32 (VPU)
    y = jnp.dot(h.astype(jnp.bfloat16), w2_ref[...],
                preferred_element_type=jnp.float32)
    o_ref[...] = y + b2_ref[...]


def _mlp_ktiled_kernel(x_ref, w1_ref, b1_ref, w2_ref, b2_ref, o_ref, h_acc):
    # Fallback for weights too large to keep resident.  Grid = (batch, K) with K
    # (flattened input features) as the last, "arbitrary" reduction axis.
    # Layer-1 partial products accumulate into a VMEM f32 scratch; bias + ReLU +
    # layer-2 run once at the final K step (w2/b1/b2 stay VMEM-resident).
    k = pl.program_id(1)

    @pl.when(k == 0)
    def _():
        h_acc[...] = jnp.zeros_like(h_acc)

    h_acc[...] += jnp.dot(x_ref[...].astype(jnp.bfloat16), w1_ref[...],
                          preferred_element_type=jnp.float32)

    @pl.when(k == pl.num_programs(1) - 1)
    def _():
        h = jnp.maximum(h_acc[...] + b1_ref[...], 0.0)
        y = jnp.dot(h.astype(jnp.bfloat16), w2_ref[...],
                    preferred_element_type=jnp.float32)
        o_ref[...] = y + b2_ref[...]


# --------------------------------------------------------------------------- #
# Parameter prep (one-time, analogous to module init)
# --------------------------------------------------------------------------- #
def prepare_params(w1, b1, w2, b2):
    """Transpose to (in, out), zero-pad (K to 128 for the K-tiled path, H/O to
    128 for lane-dense layout), cast matmul operands to bf16.  The zero padding
    is a required invariant: padded K rows / H columns contribute exactly 0."""
    hidden, d_in = w1.shape
    out_dim = w2.shape[0]
    d_in_p = _round_up(d_in, 128)
    h_p = _round_up(hidden, 128)
    o_p = _round_up(out_dim, 128)

    w1_p = jnp.zeros((d_in_p, h_p), jnp.bfloat16).at[:d_in, :hidden].set(
        w1.T.astype(jnp.bfloat16))
    w2_p = jnp.zeros((h_p, o_p), jnp.bfloat16).at[:hidden, :out_dim].set(
        w2.T.astype(jnp.bfloat16))
    b1_p = jnp.zeros((1, h_p), jnp.float32).at[0, :hidden].set(b1.astype(jnp.float32))
    b2_p = jnp.zeros((1, o_p), jnp.float32).at[0, :out_dim].set(b2.astype(jnp.float32))
    return w1_p, b1_p, w2_p, b2_p


# --------------------------------------------------------------------------- #
# Forward
# --------------------------------------------------------------------------- #
@functools.partial(
    jax.jit,
    static_argnames=("out_dim", "mode", "tb", "tk", "single_buffer_weights"))
def mlp_forward(x, w1_p, b1_p, w2_p, b2_p, *, out_dim, mode="auto", tb=None,
                tk=512, single_buffer_weights=True):
    """x: (B, C, H, W).  Returns (B, out_dim) f32 == l2(relu(l1(flatten(x))))."""
    B = x.shape[0]
    x2d = x.reshape(B, -1)                    # nn.Flatten (row-major; metadata-only)
    d_in = x2d.shape[1]
    d_in_p, h_p = w1_p.shape
    o_p = w2_p.shape[1]
    if d_in > d_in_p:
        raise ValueError("input feature size larger than prepared w1")

    # ---- batch tile --------------------------------------------------------
    if tb is None:
        tb = _pick_batch_tile(B)
    if tb >= B:
        tb = B                                # full-extent block: no dead rows
    else:
        tb = min(max(8, _round_up(tb, 8)), B) # sublane-aligned; remainder block masked
    grid_b = pl.cdiv(B, tb)

    # ---- plan selection ----------------------------------------------------
    w_bytes = w1_p.size * 2 + w2_p.size * 2   # bf16 resident weights
    plan = mode
    if plan == "auto":
        # Keep both weight matrices VMEM-resident while they fit comfortably on
        # the smallest-VMEM generation (v7x: 64 MiB physical / 32 MiB scoped).
        plan = "resident" if w_bytes <= (24 << 20) else "ktiled"

    wt_buf = 1 if single_buffer_weights else 2

    if plan == "resident":
        vmem_need = (2 * tb * d_in * x2d.dtype.itemsize            # x tiles (x2 buffered)
                     + wt_buf * (w1_p.size * 2 + b1_p.size * 4
                                 + w2_p.size * 2 + b2_p.size * 4)  # resident params
                     + 2 * tb * o_p * 4                            # out tiles (x2 buffered)
                     + tb * h_p * (4 + 2))                         # f32 hidden + bf16 copy
        flops = 2 * grid_b * tb * (d_in * h_p + h_p * o_p)
        bytes_accessed = (B * d_in * x2d.dtype.itemsize
                          + w1_p.size * 2 + b1_p.size * 4
                          + w2_p.size * 2 + b2_p.size * 4 + B * o_p * 4)

        out = pl.pallas_call(
            functools.partial(_mlp_resident_kernel, d_in=d_in),
            out_shape=jax.ShapeDtypeStruct((B, o_p), jnp.float32),
            grid_spec=pltpu.PrefetchScalarGridSpec(
                num_scalar_prefetch=0,
                grid=(grid_b,),
                in_specs=[
                    pl.BlockSpec((tb, d_in), lambda i: (i, 0)),     # x: streamed tiles
                    _param_spec((d_in_p, h_p), lambda i: (0, 0), single_buffer_weights),
                    _param_spec((1, h_p), lambda i: (0, 0), single_buffer_weights),
                    _param_spec((h_p, o_p), lambda i: (0, 0), single_buffer_weights),
                    _param_spec((1, o_p), lambda i: (0, 0), single_buffer_weights),
                ],
                out_specs=pl.BlockSpec((tb, o_p), lambda i: (i, 0)),
            ),
            compiler_params=pltpu.CompilerParams(
                dimension_semantics=("parallel",),                  # megacore-shardable batch
                vmem_limit_bytes=_vmem_limit_bytes(vmem_need)),
            cost_estimate=pl.CostEstimate(flops=flops, transcendentals=0,
                                          bytes_accessed=bytes_accessed),
        )(x2d, w1_p, b1_p, w2_p, b2_p)

    elif plan == "ktiled":
        tk_eff = max(128, min(_round_up(tk, 128), d_in_p))
        while d_in_p % tk_eff:                # tk must tile the zero-padded K exactly
            tk_eff -= 128
        grid_k = d_in_p // tk_eff

        if d_in == d_in_p:
            x_in = x2d                        # no pad needed; cast in-kernel
        else:
            # K-tiled blocks index past d_in: pad with zeros so padded lanes
            # contribute exactly 0 against w1_p's zero rows (cast here to halve
            # the one unavoidable padding pass).
            x_in = jnp.pad(x2d.astype(jnp.bfloat16), ((0, 0), (0, d_in_p - d_in)))

        vmem_need = (2 * tb * tk_eff * x_in.dtype.itemsize
                     + 2 * tk_eff * h_p * 2                          # streamed w1 tiles
                     + wt_buf * (b1_p.size * 4 + w2_p.size * 2 + b2_p.size * 4)
                     + 2 * tb * o_p * 4
                     + tb * h_p * (4 + 4 + 2))                       # acc + f32 h + bf16 h
        flops = 2 * grid_b * tb * (d_in_p * h_p + h_p * o_p)
        bytes_accessed = (B * d_in_p * x_in.dtype.itemsize
                          + grid_b * w1_p.size * 2 + b1_p.size * 4
                          + w2_p.size * 2 + b2_p.size * 4 + B * o_p * 4)

        out = pl.pallas_call(
            _mlp_ktiled_kernel,
            out_shape=jax.ShapeDtypeStruct((B, o_p), jnp.float32),
            grid_spec=pltpu.PrefetchScalarGridSpec(
                num_scalar_prefetch=0,
                grid=(grid_b, grid_k),
                in_specs=[
                    pl.BlockSpec((tb, tk_eff), lambda i, k: (i, k)),   # x: (batch, K) tiles
                    pl.BlockSpec((tk_eff, h_p), lambda i, k: (k, 0)),  # w1: streamed over K
                    _param_spec((1, h_p), lambda i, k: (0, 0), single_buffer_weights),
                    _param_spec((h_p, o_p), lambda i, k: (0, 0), single_buffer_weights),
                    _param_spec((1, o_p), lambda i, k: (0, 0), single_buffer_weights),
                ],
                out_specs=pl.BlockSpec((tb, o_p), lambda i, k: (i, 0)),  # resident over K
                scratch_shapes=[pltpu.VMEM((tb, h_p), jnp.float32)],
            ),
            compiler_params=pltpu.CompilerParams(
                dimension_semantics=("parallel", "arbitrary"),
                vmem_limit_bytes=_vmem_limit_bytes(vmem_need)),
            cost_estimate=pl.CostEstimate(flops=flops, transcendentals=0,
                                          bytes_accessed=bytes_accessed),
        )(x_in, w1_p, b1_p, w2_p, b2_p)
    else:
        raise ValueError(f"unknown mode: {mode!r}")

    # Only the (small) lane slice remains; the padded-batch slice is gone.
    return out if out_dim == o_p else out[:, :out_dim]


def reference_forward(x, w1, b1, w2, b2):
    x2d = x.reshape(x.shape[0], -1)
    h = jnp.maximum(x2d @ w1.T + b1, 0.0)
    return h @ w2.T + b2


if __name__ == "__main__":
    key = jax.random.PRNGKey(0)
    keys = jax.random.split(key, 10)

    # ---- test 1: resident-weight path (shapes consistent with the module) ----
    B, C, Hs, Ws = 2, 4, 4, 4
    input_size = C * Hs * Ws      # 64
    hidden_size, output_size = 32, 16

    x = jax.random.normal(keys[0], (B, C, Hs, Ws), dtype=jnp.float32)
    # PyTorch Linear parameter shapes: (out, in) and (out,)
    w1 = jax.random.normal(keys[1], (hidden_size, input_size), jnp.float32) * 0.1
    b1 = jax.random.normal(keys[2], (hidden_size,), jnp.float32) * 0.1
    w2 = jax.random.normal(keys[3], (output_size, hidden_size), jnp.float32) * 0.1
    b2 = jax.random.normal(keys[4], (output_size,), jnp.float32) * 0.1
    params = prepare_params(w1, b1, w2, b2)

    single_buffer = True
    try:
        out = mlp_forward(x, *params, out_dim=output_size,
                          single_buffer_weights=True)
        jax.block_until_ready(out)
    except Exception:
        # pl.Buffered(1) not accepted by this JAX build: fall back to default
        # double-buffered weight specs (costs only VMEM, never correctness).
        single_buffer = False
        out = mlp_forward(x, *params, out_dim=output_size,
                          single_buffer_weights=False)
        jax.block_until_ready(out)

    ref = reference_forward(x, w1, b1, w2, b2)
    assert out.shape == (B, output_size)
    # Tolerance loosened vs. pure f32 because matmul inputs are bf16 (f32 acc).
    assert jnp.allclose(out, ref, atol=5e-2, rtol=5e-2), float(jnp.max(jnp.abs(out - ref)))

    # ---- test 2: exercise the K-tiled fallback (used for weights too large
    # ---- to keep VMEM-resident, e.g. wide MLPs on v7x's 64 MiB) --------------
    B2, C2, H2, W2 = 4, 4, 8, 8
    in2, hid2, out2 = C2 * H2 * W2, 32, 16    # d_in = 256 -> two K tiles of 128
    x2 = jax.random.normal(keys[5], (B2, C2, H2, W2), jnp.float32)
    w1b = jax.random.normal(keys[6], (hid2, in2), jnp.float32) * 0.1
    b1b = jax.random.normal(keys[7], (hid2,), jnp.float32) * 0.1
    w2b = jax.random.normal(keys[8], (out2, hid2), jnp.float32) * 0.1
    b2b = jax.random.normal(keys[9], (out2,), jnp.float32) * 0.1
    params2 = prepare_params(w1b, b1b, w2b, b2b)

    out_kt = mlp_forward(x2, *params2, out_dim=out2, mode="ktiled", tk=128,
                         single_buffer_weights=single_buffer)
    jax.block_until_ready(out_kt)
    ref2 = reference_forward(x2, w1b, b1b, w2b, b2b)
    assert out_kt.shape == (B2, out2)
    assert jnp.allclose(out_kt, ref2, atol=5e-2, rtol=5e-2), float(jnp.max(jnp.abs(out_kt - ref2)))

    print("KERNEL_OK")
</pallas_src>

<mosaic_0001>
module attributes {stable_mosaic.version = 11 : i64} {
  func.func @_mlp_resident_kernel(%arg0: i32, %arg1: memref<2x64xf32, #tpu.memory_space<vmem>>, %arg2: memref<128x128xbf16, #tpu.memory_space<vmem>>, %arg3: memref<1x128xf32, #tpu.memory_space<vmem>>, %arg4: memref<128x128xbf16, #tpu.memory_space<vmem>>, %arg5: memref<1x128xf32, #tpu.memory_space<vmem>>, %arg6: memref<2x128xf32, #tpu.memory_space<vmem>>) attributes {dimension_semantics = [#tpu.dimension_semantics<parallel>], iteration_bounds = array<i64: 1>, scalar_prefetch = 0 : i64, scratch_operands = 0 : i64, tpu.core_type = #tpu.core_type<tc>, window_params = [{transform_indices = @transform_0, window_bounds = array<i64: 2, 64>}, {pipeline_mode = #tpu.pipeline_mode<synchronous>, transform_indices = @transform_1, window_bounds = array<i64: 128, 128>}, {pipeline_mode = #tpu.pipeline_mode<synchronous>, transform_indices = @transform_2, window_bounds = array<i64: 1, 128>}, {pipeline_mode = #tpu.pipeline_mode<synchronous>, transform_indices = @transform_3, window_bounds = array<i64: 128, 128>}, {pipeline_mode = #tpu.pipeline_mode<synchronous>, transform_indices = @transform_4, window_bounds = array<i64: 1, 128>}, {transform_indices = @transform_5, window_bounds = array<i64: 2, 128>}]} {
    %c0 = arith.constant 0 : index
    %c0_0 = arith.constant 0 : index
    %0 = vector.load %arg1[%c0, %c0_0] : memref<2x64xf32, #tpu.memory_space<vmem>>, vector<2x64xf32>
    %1 = arith.truncf %0 : vector<2x64xf32> to vector<2x64xbf16>
    %c0_1 = arith.constant 0 : index
    %c0_2 = arith.constant 0 : index
    %2 = vector.load %arg2[%c0_1, %c0_2] : memref<128x128xbf16, #tpu.memory_space<vmem>>, vector<64x128xbf16>
    %cst = arith.constant dense<0.000000e+00> : vector<2x128xf32>
    %3 = tpu.matmul %1, %2, %cst {dimension_numbers = #tpu.dot_dimension_numbers<[1], [0], [0], [1], [0, 0, 1, 1], [], []>} : vector<2x64xbf16>, vector<64x128xbf16>, vector<2x128xf32> -> vector<2x128xf32>
    %c0_3 = arith.constant 0 : index
    %c0_4 = arith.constant 0 : index
    %4 = vector.load %arg3[%c0_3, %c0_4] : memref<1x128xf32, #tpu.memory_space<vmem>>, vector<1x128xf32>
    %5 = vector.broadcast %4 : vector<1x128xf32> to vector<2x128xf32>
    %6 = arith.addf %3, %5 : vector<2x128xf32>
    %cst_5 = arith.constant 0.000000e+00 : f32
    %7 = vector.broadcast %cst_5 : f32 to vector<2x128xf32>
    %8 = arith.maximumf %6, %7 : vector<2x128xf32>
    %9 = arith.truncf %8 : vector<2x128xf32> to vector<2x128xbf16>
    %c0_6 = arith.constant 0 : index
    %c0_7 = arith.constant 0 : index
    %10 = vector.load %arg4[%c0_6, %c0_7] : memref<128x128xbf16, #tpu.memory_space<vmem>>, vector<128x128xbf16>
    %cst_8 = arith.constant dense<0.000000e+00> : vector<2x128xf32>
    %11 = tpu.matmul %9, %10, %cst_8 {dimension_numbers = #tpu.dot_dimension_numbers<[1], [0], [0], [1], [0, 0, 1, 1], [], []>} : vector<2x128xbf16>, vector<128x128xbf16>, vector<2x128xf32> -> vector<2x128xf32>
    %c0_9 = arith.constant 0 : index
    %c0_10 = arith.constant 0 : index
    %12 = vector.load %arg5[%c0_9, %c0_10] : memref<1x128xf32, #tpu.memory_space<vmem>>, vector<1x128xf32>
    %13 = vector.broadcast %12 : vector<1x128xf32> to vector<2x128xf32>
    %14 = arith.addf %11, %13 : vector<2x128xf32>
    %c0_11 = arith.constant 0 : index
    %c0_12 = arith.constant 0 : index
    %15 = vector.load %arg6[%c0_11, %c0_12] : memref<2x128xf32, #tpu.memory_space<vmem>>, vector<2x128xf32>
    tpu.vector_store %arg6[%c0_11, %c0_12], %14 {strides = array<i32>} : memref<2x128xf32, #tpu.memory_space<vmem>>, vector<2x128xf32>,
    return
  }
  func.func @transform_0(%arg0: i32) -> (i32, i32) {
    %c0_i32 = arith.constant 0 : i32
    %c0_i32_0 = arith.constant 0 : i32
    return %arg0, %c0_i32 : i32, i32
  }
  func.func @transform_1(%arg0: i32) -> (i32, i32) {
    %c0_i32 = arith.constant 0 : i32
    %c0_i32_0 = arith.constant 0 : i32
    %c0_i32_1 = arith.constant 0 : i32
    return %c0_i32, %c0_i32_0 : i32, i32
  }
  func.func @transform_2(%arg0: i32) -> (i32, i32) {
    %c0_i32 = arith.constant 0 : i32
    %c0_i32_0 = arith.constant 0 : i32
    %c0_i32_1 = arith.constant 0 : i32
    return %c0_i32, %c0_i32_0 : i32, i32
  }
  func.func @transform_3(%arg0: i32) -> (i32, i32) {
    %c0_i32 = arith.constant 0 : i32
    %c0_i32_0 = arith.constant 0 : i32
    %c0_i32_1 = arith.constant 0 : i32
    return %c0_i32, %c0_i32_0 : i32, i32
  }
  func.func @transform_4(%arg0: i32) -> (i32, i32) {
    %c0_i32 = arith.constant 0 : i32
    %c0_i32_0 = arith.constant 0 : i32
    %c0_i32_1 = arith.constant 0 : i32
    return %c0_i32, %c0_i32_0 : i32, i32
  }
  func.func @transform_5(%arg0: i32) -> (i32, i32) {
    %c0_i32 = arith.constant 0 : i32
    %c0_i32_0 = arith.constant 0 : i32
    return %arg0, %c0_i32 : i32, i32
  }
}

module attributes {stable_mosaic.version = 11 : i64} {
  func.func @_mlp_resident_kernel(%arg0: i32, %arg1: memref<2x64xf32, #tpu.memory_space<vmem>>, %arg2: memref<128x128xbf16, #tpu.memory_space<vmem>>, %arg3: memref<1x128xf32, #tpu.memory_space<vmem>>, %arg4: memref<128x128xbf16, #tpu.memory_space<vmem>>, %arg5: memref<1x128xf32, #tpu.memory_space<vmem>>, %arg6: memref<2x128xf32, #tpu.memory_space<vmem>>) attributes {dimension_semantics = [#tpu.dimension_semantics<parallel>], iteration_bounds = array<i64: 1>, scalar_prefetch = 0 : i64, scratch_operands = 0 : i64, tpu.core_type = #tpu.core_type<tc>, window_params = [{transform_indices = @transform_0, window_bounds = array<i64: 2, 64>}, {pipeline_mode = #tpu.pipeline_mode<synchronous>, transform_indices = @transform_1, window_bounds = array<i64: 128, 128>}, {pipeline_mode = #tpu.pipeline_mode<synchronous>, transform_indices = @transform_2, window_bounds = array<i64: 1, 128>}, {pipeline_mode = #tpu.pipeline_mode<synchronous>, transform_indices = @transform_3, window_bounds = array<i64: 128, 128>}, {pipeline_mode = #tpu.pipeline_mode<synchronous>, transform_indices = @transform_4, window_bounds = array<i64: 1, 128>}, {transform_indices = @transform_5, window_bounds = array<i64: 2, 128>}]} {
    %c0 = arith.constant 0 : index
    %c0_0 = arith.constant 0 : index
    %0 = vector.load %arg1[%c0, %c0_0] : memref<2x64xf32, #tpu.memory_space<vmem>>, vector<2x64xf32>
    %1 = arith.truncf %0 : vector<2x64xf32> to vector<2x64xbf16>
    %c0_1 = arith.constant 0 : index
    %c0_2 = arith.constant 0 : index
    %2 = vector.load %arg2[%c0_1, %c0_2] : memref<128x128xbf16, #tpu.memory_space<vmem>>, vector<64x128xbf16>
    %cst = arith.constant dense<0.000000e+00> : vector<2x128xf32>
    %3 = tpu.matmul %1, %2, %cst {dimension_numbers = #tpu.dot_dimension_numbers<[1], [0], [0], [1], [0, 0, 1, 1], [], []>} : vector<2x64xbf16>, vector<64x128xbf16>, vector<2x128xf32> -> vector<2x128xf32>
    %c0_3 = arith.constant 0 : index
    %c0_4 = arith.constant 0 : index
    %4 = vector.load %arg3[%c0_3, %c0_4] : memref<1x128xf32, #tpu.memory_space<vmem>>, vector<1x128xf32>
    %5 = vector.broadcast %4 : vector<1x128xf32> to vector<2x128xf32>
    %6 = arith.addf %3, %5 : vector<2x128xf32>
    %cst_5 = arith.constant 0.000000e+00 : f32
    %7 = vector.broadcast %cst_5 : f32 to vector<2x128xf32>
    %8 = arith.maximumf %6, %7 : vector<2x128xf32>
    %9 = arith.truncf %8 : vector<2x128xf32> to vector<2x128xbf16>
    %c0_6 = arith.constant 0 : index
    %c0_7 = arith.constant 0 : index
    %10 = vector.load %arg4[%c0_6, %c0_7] : memref<128x128xbf16, #tpu.memory_space<vmem>>, vector<128x128xbf16>
    %cst_8 = arith.constant dense<0.000000e+00> : vector<2x128xf32>
    %11 = tpu.matmul %9, %10, %cst_8 {dimension_numbers = #tpu.dot_dimension_numbers<[1], [0], [0], [1], [0, 0, 1, 1], [], []>} : vector<2x128xbf16>, vector<128x128xbf16>, vector<2x128xf32> -> vector<2x128xf32>
    %c0_9 = arith.constant 0 : index
    %c0_10 = arith.constant 0 : index
    %12 = vector.load %arg5[%c0_9, %c0_10] : memref<1x128xf32, #tpu.memory_space<vmem>>, vector<1x128xf32>
    %13 = vector.broadcast %12 : vector<1x128xf32> to vector<2x128xf32>
    %14 = arith.addf %11, %13 : vector<2x128xf32>
    %c0_11 = arith.constant 0 : index
    %c0_12 = arith.constant 0 : index
    %15 = vector.load %arg6[%c0_11, %c0_12] : memref<2x128xf32, #tpu.memory_space<vmem>>, vector<2x128xf32>
    tpu.vector_store %arg6[%c0_11, %c0_12], %14 {strides = array<i32>} : memref<2x128xf32, #tpu.memory_space<vmem>>, vector<2x128xf32>,
    return
  }
  func.func @transform_0(%arg0: i32) -> (i32, i32) {
    %c0_i32 = arith.constant 0 : i32
    %c0_i32_0 = arith.constant 0 : i32
    return %arg0, %c0_i32 : i32, i32
  }
  func.func @transform_1(%arg0: i32) -> (i32, i32) {
    %c0_i32 = arith.constant 0 : i32
    %c0_i32_0 = arith.constant 0 : i32
    %c0_i32_1 = arith.constant 0 : i32
    return %c0_i32, %c0_i32_0 : i32, i32
  }
  func.func @transform_2(%arg0: i32) -> (i32, i32) {
    %c0_i32 = arith.constant 0 : i32
    %c0_i32_0 = arith.constant 0 : i32
    %c0_i32_1 = arith.constant 0 : i32
    return %c0_i32, %c0_i32_0 : i32, i32
  }
  func.func @transform_3(%arg0: i32) -> (i32, i32) {
    %c0_i32 = arith.constant 0 : i32
    %c0_i32_0 = arith.constant 0 : i32
    %c0_i32_1 = arith.constant 0 : i32
    return %c0_i32, %c0_i32_0 : i32, i32
  }
  func.func @transform_4(%arg0: i32) -> (i32, i32) {
    %c0_i32 = arith.constant 0 : i32
    %c0_i32_0 = arith.constant 0 : i32
    %c0_i32_1 = arith.constant 0 : i32
    return %c0_i32, %c0_i32_0 : i32, i32
  }
  func.func @transform_5(%arg0: i32) -> (i32, i32) {
    %c0_i32 = arith.constant 0 : i32
    %c0_i32_0 = arith.constant 0 : i32
    return %arg0, %c0_i32 : i32, i32
  }
}

</mosaic_0001>

<llo_original>
// kernel: mlp_forward.1
$region0: #{mlp_forward.1}
  #allocation0 [shape = 'u32[]', space=smem, size = 0x4, offset = 0x4, fixed_abs, tag = 'smem constant byte address 0x4 - core index']
  #allocation1 [shape = 'u32[72,128]{1,0:T(1,128)}', space=vmem, size = 0x9000, scoped, tag = 'internal scratch']
  %s0 = inlined_call_operand.vmem [shape: f32[2,64], index: 0, kind: input, shape index: {}]
  %s1 = inlined_call_operand.hbm [shape: bf16[128,128], index: 1, kind: input, shape index: {}]
  %s2 = inlined_call_operand.vmem [shape: f32[1,128], index: 2, kind: input, shape index: {}]
  %s3 = inlined_call_operand.hbm [shape: bf16[128,128], index: 3, kind: input, shape index: {}]
  %s4 = inlined_call_operand.vmem [shape: f32[1,128], index: 4, kind: input, shape index: {}]
  %s5 = inlined_call_operand.hbm [shape: f32[2,128], index: 5, kind: output, shape index: {}]
  %s6 = sld [smem:[#allocation0]]
  $region38: #{mlp_forward.1} parent=0
    _
  %s8 = ssub.s32 1, %s6
  %s9 = scalar_select 0, %s8, %s6
  $region1: #{mlp_forward.1} parent=0
    #allocation2 [shape = 'u8[32768]{0}', space=vmem, size = 0x8000, scoped, tag = 'input window, operand 1, single buffered']
    #allocation3 [shape = 's32[1]{0}', space=sflag, size = 0x4, scoped, tag = 'scoped memory for mlp_forward.1']
    #allocation4 [shape = 's32[1]{0}', space=sflag, size = 0x4, scoped, tag = 'scoped memory for mlp_forward.1']
    #allocation5 [shape = 'u8[32768]{0}', space=vmem, size = 0x8000, scoped, tag = 'input window, operand 3, single buffered']
    #allocation6 [shape = 's32[1]{0}', space=sflag, size = 0x4, scoped, tag = 'scoped memory for mlp_forward.1']
    #allocation7 [shape = 'u8[1024]{0}', space=vmem, size = 0x400, scoped, tag = 'output window, operand 0, single buffered']
    %10 = vsyncpa [#allocation3], 0
    %11 = vsyncpa [#allocation6], 0
    %12 = vsyncpa [#allocation4], 0
    // Predicated region
    $region2: #{mlp_forward.1} parent=1 // pred_check
      _
    $region3: #{mlp_forward.1} parent=1 // pred_check_branch
      %14 = sbr.rel (0) target = $region5
    $region4: #{mlp_forward.1} parent=1 // pred_region
      _
    $region5: #{mlp_forward.1} parent=1 // pred_fallthru
      _
    // Predicated region
    $region6: #{mlp_forward.1} parent=1 // pred_check
      _
    $region7: #{mlp_forward.1} parent=1 // pred_check_branch
      %16 = sbr.rel (0) target = $region9
    $region8: #{mlp_forward.1} parent=1 // pred_region
      %18 = vsyncadd [#allocation3], 0
      %s19 = sshll.u32 %s1, 4
      %s20 = int_to_ptr.hbm [resolvable:$true] %s19
      %s21 = sshll.u32 [#allocation2], 4
      %s22 = int_to_ptr.vmem [resolvable:$true] %s21
      %27 = dma.hbm_to_vmem [thread:$0]  %s20, 1024, %s22, [#allocation3], 64, 64, 4
    $region9: #{mlp_forward.1} parent=1 // pred_fallthru
      _
    // Predicated region
    $region10: #{mlp_forward.1} parent=1 // pred_check
      _
    $region11: #{mlp_forward.1} parent=1 // pred_check_branch
      %29 = sbr.rel (0) target = $region13
    $region12: #{mlp_forward.1} parent=1 // pred_region
      _
    $region13: #{mlp_forward.1} parent=1 // pred_fallthru
      _
    // Predicated region
    $region14: #{mlp_forward.1} parent=1 // pred_check
      _
    $region15: #{mlp_forward.1} parent=1 // pred_check_branch
      %31 = sbr.rel (0) target = $region17
    $region16: #{mlp_forward.1} parent=1 // pred_region
      %33 = vsyncadd [#allocation6], 0
      %s34 = sshll.u32 %s3, 4
      %s35 = int_to_ptr.hbm [resolvable:$true] %s34
      %s36 = sshll.u32 [#allocation5], 4
      %s37 = int_to_ptr.vmem [resolvable:$true] %s36
      %42 = dma.hbm_to_vmem [thread:$0]  %s35, 1024, %s37, [#allocation6], 64, 64, 4
    $region17: #{mlp_forward.1} parent=1 // pred_fallthru
      _
    // Predicated region
    $region18: #{mlp_forward.1} parent=1 // pred_check
      _
    $region19: #{mlp_forward.1} parent=1 // pred_check_branch
      %44 = sbr.rel (0) target = $region21
    $region20: #{mlp_forward.1} parent=1 // pred_region
      _
    $region21: #{mlp_forward.1} parent=1 // pred_fallthru
      _
    // Predicated region
    $region22: #{mlp_forward.1} parent=1 // pred_check
      _
    $region23: #{mlp_forward.1} parent=1 // pred_check_branch
      %46 = sbr.rel (0) target = $region25
    $region24: #{mlp_forward.1} parent=1 // pred_region
      %48 = dma.done [#allocation3], 1024
    $region25: #{mlp_forward.1} parent=1 // pred_fallthru
      _
    // Predicated region
    $region26: #{mlp_forward.1} parent=1 // pred_check
      _
    $region27: #{mlp_forward.1} parent=1 // pred_check_branch
      %50 = sbr.rel (0) target = $region29
    $region28: #{mlp_forward.1} parent=1 // pred_region
      %52 = dma.done [#allocation6], 1024
    $region29: #{mlp_forward.1} parent=1 // pred_fallthru
      _
    %v54 = vld [vmem:[%s0] sm:$0x3]
    %v55 = vpack.c.bf16 %v54, %v54
    %v56 = vld [vmem:[#allocation2] sm:$0xf]
    %v57 = vld [vmem:[#allocation2 + $0x4] sm:$0xf]
    %v58 = vld [vmem:[#allocation2 + $0x8] sm:$0xf]
    %v59 = vld [vmem:[#allocation2 + $0xc] sm:$0xf]
    %v60 = vld [vmem:[#allocation2 + $0x10] sm:$0xf]
    %v61 = vld [vmem:[#allocation2 + $0x14] sm:$0xf]
    %v62 = vld [vmem:[#allocation2 + $0x18] sm:$0xf]
    %v63 = vld [vmem:[#allocation2 + $0x1c] sm:$0xf]
    %v64 = vld [vmem:[%s2] sm:$0x1]
    %v66 = vperm.slane %v64, 0
    %v76 = vunpack.c.l.b16 %v56
    %v77 = vunpack.c.l.b16 %v57
    %v78 = vunpack.c.l.b16 %v58
    %v79 = vunpack.c.l.b16 %v59
    %v80 = vunpack.c.l.b16 %v60
    %v81 = vunpack.c.l.b16 %v61
    %v82 = vunpack.c.l.b16 %v62
    %v83 = vunpack.c.l.b16 %v63
    %v84 = vpack.c.b16 %v77, %v76
    %v85 = vpack.c.b16 %v79, %v78
    %v86 = vpack.c.b16 %v81, %v80
    %v87 = vpack.c.b16 %v83, %v82
    %vm92 = vcmask 523264
    %v94 = vsel %vm92, %v55, 0
    %96 = vmatpush.bf16.msra.mxu0 0
    %97 = vmatpush.bf16.msra.mxu0 0
    %98 = vmatpush.bf16.msra.mxu0 0
    %99 = vmatpush.bf16.msra.mxu0 0
    %100 = vmatpush.bf16.msra.mxu0 %v87
    %101 = vmatpush.bf16.msra.mxu0 %v86
    %102 = vmatpush.bf16.msra.mxu0 %v85
    %103 = vmatpush.bf16.msra.mxu0 %v84
    %104 = vmatmul.bf16.gmra.mxu0 %v94
    %v105 = vpop.f32.mrf.mxu0
    %v106 = vadd.f32 %v66, %v105
    %v107 = vpop.f32.mrf.mxu0
    %108 = vdwg.mxu0
    %v109 = vmax.f32 %v106, 0.0
    %v110 = vpack.c.bf16 %v109, %v109
    %v111 = vld [vmem:[#allocation5] sm:$0xf]
    %v112 = vld [vmem:[#allocation5 + $0x4] sm:$0xf]
    %v113 = vld [vmem:[#allocation5 + $0x8] sm:$0xf]
    %v114 = vld [vmem:[#allocation5 + $0xc] sm:$0xf]
    %v115 = vld [vmem:[#allocation5 + $0x10] sm:$0xf]
    %v116 = vld [vmem:[#allocation5 + $0x14] sm:$0xf]
    %v117 = vld [vmem:[#allocation5 + $0x18] sm:$0xf]
    %v118 = vld [vmem:[#allocation5 + $0x1c] sm:$0xf]
    %v119 = vld [vmem:[#allocation5 + $0x20] sm:$0xf]
    %v120 = vld [vmem:[#allocation5 + $0x24] sm:$0xf]
    %v121 = vld [vmem:[#allocation5 + $0x28] sm:$0xf]
    %v122 = vld [vmem:[#allocation5 + $0x2c] sm:$0xf]
    %v123 = vld [vmem:[#allocation5 + $0x30] sm:$0xf]
    %v124 = vld [vmem:[#allocation5 + $0x34] sm:$0xf]
    %v125 = vld [vmem:[#allocation5 + $0x38] sm:$0xf]
    %v126 = vld [vmem:[#allocation5 + $0x3c] sm:$0xf]
    %v127 = vld [vmem:[%s4] sm:$0x1]
    %v129 = vperm.slane %v127, 0
    %v147 = vunpack.c.l.b16 %v111
    %v148 = vunpack.c.l.b16 %v112
    %v149 = vunpack.c.l.b16 %v113
    %v150 = vunpack.c.l.b16 %v114
    %v151 = vunpack.c.l.b16 %v115
    %v152 = vunpack.c.l.b16 %v116
    %v153 = vunpack.c.l.b16 %v117
    %v154 = vunpack.c.l.b16 %v118
    %v155 = vunpack.c.l.b16 %v119
    %v156 = vunpack.c.l.b16 %v120
    %v157 = vunpack.c.l.b16 %v121
    %v158 = vunpack.c.l.b16 %v122
    %v159 = vunpack.c.l.b16 %v123
    %v160 = vunpack.c.l.b16 %v124
    %v161 = vunpack.c.l.b16 %v125
    %v162 = vunpack.c.l.b16 %v126
    %v163 = vpack.c.b16 %v148, %v147
    %v164 = vpack.c.b16 %v150, %v149
    %v165 = vpack.c.b16 %v152, %v151
    %v166 = vpack.c.b16 %v154, %v153
    %v167 = vpack.c.b16 %v156, %v155
    %v168 = vpack.c.b16 %v158, %v157
    %v169 = vpack.c.b16 %v160, %v159
    %v170 = vpack.c.b16 %v162, %v161
    %179 = vmatpush.bf16.msra.mxu0 %v170
    %180 = vmatpush.bf16.msra.mxu0 %v169
    %181 = vmatpush.bf16.msra.mxu0 %v168
    %182 = vmatpush.bf16.msra.mxu0 %v167
    %183 = vmatpush.bf16.msra.mxu0 %v166
    %184 = vmatpush.bf16.msra.mxu0 %v165
    %185 = vmatpush.bf16.msra.mxu0 %v164
    %186 = vmatpush.bf16.msra.mxu0 %v163
    %187 = vmatmul.bf16.gmra.mxu0 %v110
    %v188 = vpop.f32.mrf.mxu0
    %v189 = vadd.f32 %v129, %v188
    %v190 = vpop.f32.mrf.mxu0
    %191 = vdwg.mxu0
    %192 = vst [vmem:[#allocation7] sm:$0x3] %v189
    // Predicated region
    $region30: #{mlp_forward.1} parent=1 // pred_check
      _
    $region31: #{mlp_forward.1} parent=1 // pred_check_branch
      %194 = sbr.rel (0) target = $region33
    $region32: #{mlp_forward.1} parent=1 // pred_region
      %196 = vsyncadd [#allocation4], 0
      %s198 = sshll.u32 [#allocation7], 4
      %s199 = int_to_ptr.vmem [resolvable:$true] %s198
      %s200 = sshll.u32 %s5, 4
      %s201 = int_to_ptr.hbm [resolvable:$true] %s200
      %203 = dma.vmem_to_hbm [thread:$0]  %s199, 32, %s201, [#allocation4]
    $region33: #{mlp_forward.1} parent=1 // pred_fallthru
      _
    // Predicated region
    $region34: #{mlp_forward.1} parent=1 // pred_check
      _
    $region35: #{mlp_forward.1} parent=1 // pred_check_branch
      %205 = sbr.rel (0) target = $region37
    $region36: #{mlp_forward.1} parent=1 // pred_region
      %207 = dma.done [#allocation4], 32
    $region37: #{mlp_forward.1} parent=1 // pred_fallthru
      _
    %208 = vsyncpa [#allocation3], 1
    %209 = vsyncpa [#allocation6], 1
    %210 = vsyncpa [#allocation4], 1

// kernel: mlp_forward.1
$region0: #{mlp_forward.1}
  #allocation0 [shape = 'u32[]', space=smem, size = 0x4, offset = 0x4, fixed_abs, tag = 'smem constant byte address 0x4 - core index']
  #allocation1 [shape = 'u32[72,128]{1,0:T(1,128)}', space=vmem, size = 0x9000, scoped, tag = 'internal scratch']
  %s0 = inlined_call_operand.vmem [shape: f32[2,64], index: 0, kind: input, shape index: {}]
  %s1 = inlined_call_operand.hbm [shape: bf16[128,128], index: 1, kind: input, shape index: {}]
  %s2 = inlined_call_operand.vmem [shape: f32[1,128], index: 2, kind: input, shape index: {}]
  %s3 = inlined_call_operand.hbm [shape: bf16[128,128], index: 3, kind: input, shape index: {}]
  %s4 = inlined_call_operand.vmem [shape: f32[1,128], index: 4, kind: input, shape index: {}]
  %s5 = inlined_call_operand.hbm [shape: f32[2,128], index: 5, kind: output, shape index: {}]
  %s6 = sld [smem:[#allocation0]]
  $region38: #{mlp_forward.1} parent=0
    _
  %s8 = ssub.s32 1, %s6
  %s9 = scalar_select 0, %s8, %s6
  $region1: #{mlp_forward.1} parent=0
    #allocation2 [shape = 'u8[32768]{0}', space=vmem, size = 0x8000, scoped, tag = 'input window, operand 1, single buffered']
    #allocation3 [shape = 's32[1]{0}', space=sflag, size = 0x4, scoped, tag = 'scoped memory for mlp_forward.1']
    #allocation4 [shape = 's32[1]{0}', space=sflag, size = 0x4, scoped, tag = 'scoped memory for mlp_forward.1']
    #allocation5 [shape = 'u8[32768]{0}', space=vmem, size = 0x8000, scoped, tag = 'input window, operand 3, single buffered']
    #allocation6 [shape = 's32[1]{0}', space=sflag, size = 0x4, scoped, tag = 'scoped memory for mlp_forward.1']
    #allocation7 [shape = 'u8[1024]{0}', space=vmem, size = 0x400, scoped, tag = 'output window, operand 0, single buffered']
    %10 = vsyncpa [#allocation3], 0
    %11 = vsyncpa [#allocation6], 0
    %12 = vsyncpa [#allocation4], 0
    // Predicated region
    $region2: #{mlp_forward.1} parent=1 // pred_check
      _
    $region3: #{mlp_forward.1} parent=1 // pred_check_branch
      %14 = sbr.rel (0) target = $region5
    $region4: #{mlp_forward.1} parent=1 // pred_region
      _
    $region5: #{mlp_forward.1} parent=1 // pred_fallthru
      _
    // Predicated region
    $region6: #{mlp_forward.1} parent=1 // pred_check
      _
    $region7: #{mlp_forward.1} parent=1 // pred_check_branch
      %16 = sbr.rel (0) target = $region9
    $region8: #{mlp_forward.1} parent=1 // pred_region
      %18 = vsyncadd [#allocation3], 0
      %s19 = sshll.u32 %s1, 4
      %s20 = int_to_ptr.hbm [resolvable:$true] %s19
      %s21 = sshll.u32 [#allocation2], 4
      %s22 = int_to_ptr.vmem [resolvable:$true] %s21
      %27 = dma.hbm_to_vmem [thread:$0]  %s20, 1024, %s22, [#allocation3], 64, 64, 4
    $region9: #{mlp_forward.1} parent=1 // pred_fallthru
      _
    // Predicated region
    $region10: #{mlp_forward.1} parent=1 // pred_check
      _
    $region11: #{mlp_forward.1} parent=1 // pred_check_branch
      %29 = sbr.rel (0) target = $region13
    $region12: #{mlp_forward.1} parent=1 // pred_region
      _
    $region13: #{mlp_forward.1} parent=1 // pred_fallthru
      _
    // Predicated region
    $region14: #{mlp_forward.1} parent=1 // pred_check
      _
    $region15: #{mlp_forward.1} parent=1 // pred_check_branch
      %31 = sbr.rel (0) target = $region17
    $region16: #{mlp_forward.1} parent=1 // pred_region
      %33 = vsyncadd [#allocation6], 0
      %s34 = sshll.u32 %s3, 4
      %s35 = int_to_ptr.hbm [resolvable:$true] %s34
      %s36 = sshll.u32 [#allocation5], 4
      %s37 = int_to_ptr.vmem [resolvable:$true] %s36
      %42 = dma.hbm_to_vmem [thread:$0]  %s35, 1024, %s37, [#allocation6], 64, 64, 4
    $region17: #{mlp_forward.1} parent=1 // pred_fallthru
      _
    // Predicated region
    $region18: #{mlp_forward.1} parent=1 // pred_check
      _
    $region19: #{mlp_forward.1} parent=1 // pred_check_branch
      %44 = sbr.rel (0) target = $region21
    $region20: #{mlp_forward.1} parent=1 // pred_region
      _
    $region21: #{mlp_forward.1} parent=1 // pred_fallthru
      _
    // Predicated region
    $region22: #{mlp_forward.1} parent=1 // pred_check
      _
    $region23: #{mlp_forward.1} parent=1 // pred_check_branch
      %46 = sbr.rel (0) target = $region25
    $region24: #{mlp_forward.1} parent=1 // pred_region
      %48 = dma.done [#allocation3], 1024
    $region25: #{mlp_forward.1} parent=1 // pred_fallthru
      _
    // Predicated region
    $region26: #{mlp_forward.1} parent=1 // pred_check
      _
    $region27: #{mlp_forward.1} parent=1 // pred_check_branch
      %50 = sbr.rel (0) target = $region29
    $region28: #{mlp_forward.1} parent=1 // pred_region
      %52 = dma.done [#allocation6], 1024
    $region29: #{mlp_forward.1} parent=1 // pred_fallthru
      _
    %v54 = vld [vmem:[%s0] sm:$0x3]
    %v55 = vpack.c.bf16 %v54, %v54
    %v56 = vld [vmem:[#allocation2] sm:$0xf]
    %v57 = vld [vmem:[#allocation2 + $0x4] sm:$0xf]
    %v58 = vld [vmem:[#allocation2 + $0x8] sm:$0xf]
    %v59 = vld [vmem:[#allocation2 + $0xc] sm:$0xf]
    %v60 = vld [vmem:[#allocation2 + $0x10] sm:$0xf]
    %v61 = vld [vmem:[#allocation2 + $0x14] sm:$0xf]
    %v62 = vld [vmem:[#allocation2 + $0x18] sm:$0xf]
    %v63 = vld [vmem:[#allocation2 + $0x1c] sm:$0xf]
    %v64 = vld [vmem:[%s2] sm:$0x1]
    %v66 = vperm.slane %v64, 0
    %v76 = vunpack.c.l.b16 %v56
    %v77 = vunpack.c.l.b16 %v57
    %v78 = vunpack.c.l.b16 %v58
    %v79 = vunpack.c.l.b16 %v59
    %v80 = vunpack.c.l.b16 %v60
    %v81 = vunpack.c.l.b16 %v61
    %v82 = vunpack.c.l.b16 %v62
    %v83 = vunpack.c.l.b16 %v63
    %v84 = vpack.c.b16 %v77, %v76
    %v85 = vpack.c.b16 %v79, %v78
    %v86 = vpack.c.b16 %v81, %v80
    %v87 = vpack.c.b16 %v83, %v82
    %vm92 = vcmask 523264
    %v94 = vsel %vm92, %v55, 0
    %96 = vmatpush.bf16.msra.mxu0 0
    %97 = vmatpush.bf16.msra.mxu0 0
    %98 = vmatpush.bf16.msra.mxu0 0
    %99 = vmatpush.bf16.msra.mxu0 0
    %100 = vmatpush.bf16.msra.mxu0 %v87
    %101 = vmatpush.bf16.msra.mxu0 %v86
    %102 = vmatpush.bf16.msra.mxu0 %v85
    %103 = vmatpush.bf16.msra.mxu0 %v84
    %104 = vmatmul.bf16.gmra.mxu0 %v94
    %v105 = vpop.f32.mrf.mxu0
    %v106 = vadd.f32 %v66, %v105
    %v107 = vpop.f32.mrf.mxu0
    %108 = vdwg.mxu0
    %v109 = vmax.f32 %v106, 0.0
    %v110 = vpack.c.bf16 %v109, %v109
    %v111 = vld [vmem:[#allocation5] sm:$0xf]
    %v112 = vld [vmem:[#allocation5 + $0x4] sm:$0xf]
    %v113 = vld [vmem:[#allocation5 + $0x8] sm:$0xf]
    %v114 = vld [vmem:[#allocation5 + $0xc] sm:$0xf]
    %v115 = vld [vmem:[#allocation5 + $0x10] sm:$0xf]
    %v116 = vld [vmem:[#allocation5 + $0x14] sm:$0xf]
    %v117 = vld [vmem:[#allocation5 + $0x18] sm:$0xf]
    %v118 = vld [vmem:[#allocation5 + $0x1c] sm:$0xf]
    %v119 = vld [vmem:[#allocation5 + $0x20] sm:$0xf]
    %v120 = vld [vmem:[#allocation5 + $0x24] sm:$0xf]
    %v121 = vld [vmem:[#allocation5 + $0x28] sm:$0xf]
    %v122 = vld [vmem:[#allocation5 + $0x2c] sm:$0xf]
    %v123 = vld [vmem:[#allocation5 + $0x30] sm:$0xf]
    %v124 = vld [vmem:[#allocation5 + $0x34] sm:$0xf]
    %v125 = vld [vmem:[#allocation5 + $0x38] sm:$0xf]
    %v126 = vld [vmem:[#allocation5 + $0x3c] sm:$0xf]
    %v127 = vld [vmem:[%s4] sm:$0x1]
    %v129 = vperm.slane %v127, 0
    %v147 = vunpack.c.l.b16 %v111
    %v148 = vunpack.c.l.b16 %v112
    %v149 = vunpack.c.l.b16 %v113
    %v150 = vunpack.c.l.b16 %v114
    %v151 = vunpack.c.l.b16 %v115
    %v152 = vunpack.c.l.b16 %v116
    %v153 = vunpack.c.l.b16 %v117
    %v154 = vunpack.c.l.b16 %v118
    %v155 = vunpack.c.l.b16 %v119
    %v156 = vunpack.c.l.b16 %v120
    %v157 = vunpack.c.l.b16 %v121
    %v158 = vunpack.c.l.b16 %v122
    %v159 = vunpack.c.l.b16 %v123
    %v160 = vunpack.c.l.b16 %v124
    %v161 = vunpack.c.l.b16 %v125
    %v162 = vunpack.c.l.b16 %v126
    %v163 = vpack.c.b16 %v148, %v147
    %v164 = vpack.c.b16 %v150, %v149
    %v165 = vpack.c.b16 %v152, %v151
    %v166 = vpack.c.b16 %v154, %v153
    %v167 = vpack.c.b16 %v156, %v155
    %v168 = vpack.c.b16 %v158, %v157
    %v169 = vpack.c.b16 %v160, %v159
    %v170 = vpack.c.b16 %v162, %v161
    %179 = vmatpush.bf16.msra.mxu0 %v170
    %180 = vmatpush.bf16.msra.mxu0 %v169
    %181 = vmatpush.bf16.msra.mxu0 %v168
    %182 = vmatpush.bf16.msra.mxu0 %v167
    %183 = vmatpush.bf16.msra.mxu0 %v166
    %184 = vmatpush.bf16.msra.mxu0 %v165
    %185 = vmatpush.bf16.msra.mxu0 %v164
    %186 = vmatpush.bf16.msra.mxu0 %v163
    %187 = vmatmul.bf16.gmra.mxu0 %v110
    %v188 = vpop.f32.mrf.mxu0
    %v189 = vadd.f32 %v129, %v188
    %v190 = vpop.f32.mrf.mxu0
    %191 = vdwg.mxu0
    %192 = vst [vmem:[#allocation7] sm:$0x3] %v189
    // Predicated region
    $region30: #{mlp_forward.1} parent=1 // pred_check
      _
    $region31: #{mlp_forward.1} parent=1 // pred_check_branch
      %194 = sbr.rel (0) target = $region33
    $region32: #{mlp_forward.1} parent=1 // pred_region
      %196 = vsyncadd [#allocation4], 0
      %s198 = sshll.u32 [#allocation7], 4
      %s199 = int_to_ptr.vmem [resolvable:$true] %s198
      %s200 = sshll.u32 %s5, 4
      %s201 = int_to_ptr.hbm [resolvable:$true] %s200
      %203 = dma.vmem_to_hbm [thread:$0]  %s199, 32, %s201, [#allocation4]
    $region33: #{mlp_forward.1} parent=1 // pred_fallthru
      _
    // Predicated region
    $region34: #{mlp_forward.1} parent=1 // pred_check
      _
    $region35: #{mlp_forward.1} parent=1 // pred_check_branch
      %205 = sbr.rel (0) target = $region37
    $region36: #{mlp_forward.1} parent=1 // pred_region
      %207 = dma.done [#allocation4], 32
    $region37: #{mlp_forward.1} parent=1 // pred_fallthru
      _
    %208 = vsyncpa [#allocation3], 1
    %209 = vsyncpa [#allocation6], 1
    %210 = vsyncpa [#allocation4], 1

</llo_original>
